<compile_context>
chip_gen: v5e
topology: v5e:2x2
jax: 0.10.0
libtpu: 0.0.40
codegen_flags: <defaults>
</compile_context>

<pallas_src>
import functools

import jax
import jax.numpy as jnp
from jax.experimental import pallas as pl
from jax.experimental.pallas import tpu as pltpu


# ---------------------------------------------------------------------------
# Fused gather kernel: B data-dependent row DMAs HBM -> (B, D) VMEM output,
# `depth` copies kept in flight via a semaphore ring.
# ---------------------------------------------------------------------------
def _gather_kernel(ids_ref, emb_hbm, out_ref, sem, *, n_rows: int, depth: int):
    # ids_ref : SMEM (B,) int32  (scalar-prefetched last-item ids, already clamped)
    # emb_hbm : HBM  (V, D)      (raw ref, memory_space=pl.ANY)
    # out_ref : VMEM (B, D)      (dense output slab)
    # sem     : DMA semaphores (depth,)

    def _copy(row, b, slot):
        return pltpu.make_async_copy(
            emb_hbm.at[pl.ds(row, 1), :],
            out_ref.at[pl.ds(b, 1), :],
            sem.at[slot],
        )

    def _issue(b, slot):
        _copy(ids_ref[b], b, slot).start()

    def _wait(slot):
        # Dummy (row 0 -> row 0) descriptor: .wait() only needs the copy size + sem.
        _copy(0, 0, slot).wait()

    n_prime = min(depth, n_rows)

    # Prime: fill the DMA window (static unroll, depth is small).
    for b in range(n_prime):
        _issue(b, b % depth)

    # Steady state: reuse a slot only after its previous copy completed.
    if n_rows > n_prime:
        def body(b, carry):
            slot = b % depth
            _wait(slot)
            _issue(b, slot)
            return carry

        jax.lax.fori_loop(n_prime, n_rows, body, 0)

    # Drain the last `n_prime` outstanding copies in issue order.
    for s in range(n_prime):
        _wait((n_rows - n_prime + s) % depth)


def last_item_state_agg(items: jax.Array, emb_table: jax.Array,
                        *, max_outstanding: int = 8) -> jax.Array:
    """items: (S, B) int32 ids; emb_table: (V, D) float -> (B, D) of emb_table.dtype."""
    S, B = items.shape
    V, D = emb_table.shape

    # Last-item id selection: a few-vreg int32 reduction — leave it to XLA (no extra
    # kernel launch, no HBM round trip through a dedicated pallas_call).
    if B == 1:
        # state.items.size(1) == 1 branch: last_item = items[-1]
        last_ids = items[S - 1]                                  # (1,)
    else:
        seq_lens = jnp.sum(items != 0, axis=0)                   # pad id == 0
        last_idx = jnp.maximum(seq_lens - 1, 0)                  # (B,)
        last_ids = jnp.take_along_axis(items, last_idx[None, :], axis=0)[0]
    # Clamp so the data-dependent row DMA can never go out of bounds.
    last_ids = jnp.clip(last_ids, 0, V - 1).astype(jnp.int32)

    depth = max(1, min(max_outstanding, B))

    # NOTE: the whole (B, D) output slab lives in VMEM for one grid step; for very large
    # B one would tile B across grid steps (and only then consider "parallel" on v7x).
    kernel = functools.partial(_gather_kernel, n_rows=B, depth=depth)
    out = pl.pallas_call(
        kernel,
        out_shape=jax.ShapeDtypeStruct((B, D), emb_table.dtype),
        grid_spec=pltpu.PrefetchScalarGridSpec(
            num_scalar_prefetch=1,
            grid=(1,),
            in_specs=[
                pl.BlockSpec(memory_space=pl.ANY),               # table stays in HBM
            ],
            out_specs=pl.BlockSpec((B, D), lambda i, ids: (0, 0)),
            scratch_shapes=[pltpu.SemaphoreType.DMA((depth,))],
        ),
        compiler_params=pltpu.CompilerParams(
            dimension_semantics=("arbitrary",),
        ),
    )(last_ids, emb_table)
    return out


def _reference_forward(items, emb_table):
    """Pure-JAX mirror of LastItemStateAgg.forward for verification."""
    S, B = items.shape
    if B == 1:
        last_ids = items[-1]                                     # (1,)
    else:
        seq_lens = jnp.sum(items != 0, axis=0)
        last_idx = seq_lens - 1
        last_ids = items[last_idx, jnp.arange(B)]
    return emb_table[last_ids]                                   # (B, D)


if __name__ == "__main__":
    # Small, deterministic synthetic problem. D is a multiple of 128 (lane-dense output).
    S, B = 8, 8            # seq_len, batch
    V, D = 64, 128         # vocab size, embedding_dim (= state_size)

    key = jax.random.PRNGKey(0)
    k_items, k_lens, k_emb = jax.random.split(key, 3)

    # Padded sequences: valid ids in [1, V), trailing padding id 0.
    items = jax.random.randint(k_items, (S, B), 1, V, dtype=jnp.int32)
    seq_lens = jax.random.randint(k_lens, (B,), 1, S + 1, dtype=jnp.int32)
    pad_mask = jnp.arange(S)[:, None] < seq_lens[None, :]
    items = jnp.where(pad_mask, items, 0)

    # Deterministic "CustomEmbedding" weight (synthetic, not a checkpoint).
    emb_table = jax.random.normal(k_emb, (V, D), dtype=jnp.float32)

    # Multi-column (padded) branch.
    out = jax.block_until_ready(last_item_state_agg(items, emb_table))
    ref = _reference_forward(items, emb_table)
    assert out.shape == (B, D), out.shape
    assert jnp.allclose(out, ref, atol=0.0, rtol=0.0), "mismatch vs reference (padded batch)"

    # Single-column branch (state.items.size(1) == 1 -> take items[-1]).
    items1 = items[:, :1]
    out1 = jax.block_until_ready(last_item_state_agg(items1, emb_table))
    ref1 = _reference_forward(items1, emb_table)
    assert out1.shape == (1, D), out1.shape
    assert jnp.allclose(out1, ref1, atol=0.0, rtol=0.0), "mismatch vs reference (batch=1)"

    print("KERNEL_OK")
</pallas_src>

<mosaic_0001>
module attributes {stable_mosaic.version = 11 : i64} {
  func.func @_gather_kernel(%arg0: i32, %arg1: memref<8xi32, #tpu.memory_space<smem>>, %arg2: memref<64x128xf32, #tpu.memory_space<any>>, %arg3: memref<8x128xf32, #tpu.memory_space<vmem>>, %arg4: memref<8x!tpu.dma_semaphore, #tpu.memory_space<semaphore_mem>>) attributes {dimension_semantics = [#tpu.dimension_semantics<arbitrary>], iteration_bounds = array<i64: 1>, scalar_prefetch = 1 : i64, scratch_operands = 1 : i64, tpu.core_type = #tpu.core_type<tc>, window_params = [{}, {pipeline_mode = #tpu.pipeline_mode<synchronous>, transform_indices = @transform_1, window_bounds = array<i64: 8, 128>}]} {
    %c0 = arith.constant 0 : index
    %0 = memref.load %arg1[%c0] : memref<8xi32, #tpu.memory_space<smem>>
    %c0_i32 = arith.constant 0 : i32
    %c0_i32_0 = arith.constant 0 : i32
    %1 = tpu.memref_slice %arg2[%0, %c0_i32_0] : memref<64x128xf32, #tpu.memory_space<any>> -> memref<1x128xf32, #tpu.memory_space<any>>
    %c0_i32_1 = arith.constant 0 : i32
    %c0_i32_2 = arith.constant 0 : i32
    %2 = tpu.memref_slice %arg3[%c0_i32_1, %c0_i32_2] : memref<8x128xf32, #tpu.memory_space<vmem>> -> memref<1x128xf32, #tpu.memory_space<vmem>>
    %3 = tpu.memref_slice %arg4[%c0_i32] : memref<8x!tpu.dma_semaphore, #tpu.memory_space<semaphore_mem>> -> memref<1x!tpu.dma_semaphore, #tpu.memory_space<semaphore_mem>>
    %4 = tpu.memref_squeeze %3 : memref<1x!tpu.dma_semaphore, #tpu.memory_space<semaphore_mem>> -> memref<!tpu.dma_semaphore, #tpu.memory_space<semaphore_mem>>
    tpu.enqueue_dma source(%1 : memref<1x128xf32, #tpu.memory_space<any>>) target(%2 : memref<1x128xf32, #tpu.memory_space<vmem>>) target_semaphore(%4 : memref<!tpu.dma_semaphore, #tpu.memory_space<semaphore_mem>>)
    %c1 = arith.constant 1 : index
    %5 = memref.load %arg1[%c1] : memref<8xi32, #tpu.memory_space<smem>>
    %c1_i32 = arith.constant 1 : i32
    %c0_i32_3 = arith.constant 0 : i32
    %6 = tpu.memref_slice %arg2[%5, %c0_i32_3] : memref<64x128xf32, #tpu.memory_space<any>> -> memref<1x128xf32, #tpu.memory_space<any>>
    %c1_i32_4 = arith.constant 1 : i32
    %c0_i32_5 = arith.constant 0 : i32
    %7 = tpu.memref_slice %arg3[%c1_i32_4, %c0_i32_5] : memref<8x128xf32, #tpu.memory_space<vmem>> -> memref<1x128xf32, #tpu.memory_space<vmem>>
    %8 = tpu.memref_slice %arg4[%c1_i32] : memref<8x!tpu.dma_semaphore, #tpu.memory_space<semaphore_mem>> -> memref<1x!tpu.dma_semaphore, #tpu.memory_space<semaphore_mem>>
    %9 = tpu.memref_squeeze %8 : memref<1x!tpu.dma_semaphore, #tpu.memory_space<semaphore_mem>> -> memref<!tpu.dma_semaphore, #tpu.memory_space<semaphore_mem>>
    tpu.enqueue_dma source(%6 : memref<1x128xf32, #tpu.memory_space<any>>) target(%7 : memref<1x128xf32, #tpu.memory_space<vmem>>) target_semaphore(%9 : memref<!tpu.dma_semaphore, #tpu.memory_space<semaphore_mem>>)
    %c2 = arith.constant 2 : index
    %10 = memref.load %arg1[%c2] : memref<8xi32, #tpu.memory_space<smem>>
    %c2_i32 = arith.constant 2 : i32
    %c0_i32_6 = arith.constant 0 : i32
    %11 = tpu.memref_slice %arg2[%10, %c0_i32_6] : memref<64x128xf32, #tpu.memory_space<any>> -> memref<1x128xf32, #tpu.memory_space<any>>
    %c2_i32_7 = arith.constant 2 : i32
    %c0_i32_8 = arith.constant 0 : i32
    %12 = tpu.memref_slice %arg3[%c2_i32_7, %c0_i32_8] : memref<8x128xf32, #tpu.memory_space<vmem>> -> memref<1x128xf32, #tpu.memory_space<vmem>>
    %13 = tpu.memref_slice %arg4[%c2_i32] : memref<8x!tpu.dma_semaphore, #tpu.memory_space<semaphore_mem>> -> memref<1x!tpu.dma_semaphore, #tpu.memory_space<semaphore_mem>>
    %14 = tpu.memref_squeeze %13 : memref<1x!tpu.dma_semaphore, #tpu.memory_space<semaphore_mem>> -> memref<!tpu.dma_semaphore, #tpu.memory_space<semaphore_mem>>
    tpu.enqueue_dma source(%11 : memref<1x128xf32, #tpu.memory_space<any>>) target(%12 : memref<1x128xf32, #tpu.memory_space<vmem>>) target_semaphore(%14 : memref<!tpu.dma_semaphore, #tpu.memory_space<semaphore_mem>>)
    %c3 = arith.constant 3 : index
    %15 = memref.load %arg1[%c3] : memref<8xi32, #tpu.memory_space<smem>>
    %c3_i32 = arith.constant 3 : i32
    %c0_i32_9 = arith.constant 0 : i32
    %16 = tpu.memref_slice %arg2[%15, %c0_i32_9] : memref<64x128xf32, #tpu.memory_space<any>> -> memref<1x128xf32, #tpu.memory_space<any>>
    %c3_i32_10 = arith.constant 3 : i32
    %c0_i32_11 = arith.constant 0 : i32
    %17 = tpu.memref_slice %arg3[%c3_i32_10, %c0_i32_11] : memref<8x128xf32, #tpu.memory_space<vmem>> -> memref<1x128xf32, #tpu.memory_space<vmem>>
    %18 = tpu.memref_slice %arg4[%c3_i32] : memref<8x!tpu.dma_semaphore, #tpu.memory_space<semaphore_mem>> -> memref<1x!tpu.dma_semaphore, #tpu.memory_space<semaphore_mem>>
    %19 = tpu.memref_squeeze %18 : memref<1x!tpu.dma_semaphore, #tpu.memory_space<semaphore_mem>> -> memref<!tpu.dma_semaphore, #tpu.memory_space<semaphore_mem>>
    tpu.enqueue_dma source(%16 : memref<1x128xf32, #tpu.memory_space<any>>) target(%17 : memref<1x128xf32, #tpu.memory_space<vmem>>) target_semaphore(%19 : memref<!tpu.dma_semaphore, #tpu.memory_space<semaphore_mem>>)
    %c4 = arith.constant 4 : index
    %20 = memref.load %arg1[%c4] : memref<8xi32, #tpu.memory_space<smem>>
    %c4_i32 = arith.constant 4 : i32
    %c0_i32_12 = arith.constant 0 : i32
    %21 = tpu.memref_slice %arg2[%20, %c0_i32_12] : memref<64x128xf32, #tpu.memory_space<any>> -> memref<1x128xf32, #tpu.memory_space<any>>
    %c4_i32_13 = arith.constant 4 : i32
    %c0_i32_14 = arith.constant 0 : i32
    %22 = tpu.memref_slice %arg3[%c4_i32_13, %c0_i32_14] : memref<8x128xf32, #tpu.memory_space<vmem>> -> memref<1x128xf32, #tpu.memory_space<vmem>>
    %23 = tpu.memref_slice %arg4[%c4_i32] : memref<8x!tpu.dma_semaphore, #tpu.memory_space<semaphore_mem>> -> memref<1x!tpu.dma_semaphore, #tpu.memory_space<semaphore_mem>>
    %24 = tpu.memref_squeeze %23 : memref<1x!tpu.dma_semaphore, #tpu.memory_space<semaphore_mem>> -> memref<!tpu.dma_semaphore, #tpu.memory_space<semaphore_mem>>
    tpu.enqueue_dma source(%21 : memref<1x128xf32, #tpu.memory_space<any>>) target(%22 : memref<1x128xf32, #tpu.memory_space<vmem>>) target_semaphore(%24 : memref<!tpu.dma_semaphore, #tpu.memory_space<semaphore_mem>>)
    %c5 = arith.constant 5 : index
    %25 = memref.load %arg1[%c5] : memref<8xi32, #tpu.memory_space<smem>>
    %c5_i32 = arith.constant 5 : i32
    %c0_i32_15 = arith.constant 0 : i32
    %26 = tpu.memref_slice %arg2[%25, %c0_i32_15] : memref<64x128xf32, #tpu.memory_space<any>> -> memref<1x128xf32, #tpu.memory_space<any>>
    %c5_i32_16 = arith.constant 5 : i32
    %c0_i32_17 = arith.constant 0 : i32
    %27 = tpu.memref_slice %arg3[%c5_i32_16, %c0_i32_17] : memref<8x128xf32, #tpu.memory_space<vmem>> -> memref<1x128xf32, #tpu.memory_space<vmem>>
    %28 = tpu.memref_slice %arg4[%c5_i32] : memref<8x!tpu.dma_semaphore, #tpu.memory_space<semaphore_mem>> -> memref<1x!tpu.dma_semaphore, #tpu.memory_space<semaphore_mem>>
    %29 = tpu.memref_squeeze %28 : memref<1x!tpu.dma_semaphore, #tpu.memory_space<semaphore_mem>> -> memref<!tpu.dma_semaphore, #tpu.memory_space<semaphore_mem>>
    tpu.enqueue_dma source(%26 : memref<1x128xf32, #tpu.memory_space<any>>) target(%27 : memref<1x128xf32, #tpu.memory_space<vmem>>) target_semaphore(%29 : memref<!tpu.dma_semaphore, #tpu.memory_space<semaphore_mem>>)
    %c6 = arith.constant 6 : index
    %30 = memref.load %arg1[%c6] : memref<8xi32, #tpu.memory_space<smem>>
    %c6_i32 = arith.constant 6 : i32
    %c0_i32_18 = arith.constant 0 : i32
    %31 = tpu.memref_slice %arg2[%30, %c0_i32_18] : memref<64x128xf32, #tpu.memory_space<any>> -> memref<1x128xf32, #tpu.memory_space<any>>
    %c6_i32_19 = arith.constant 6 : i32
    %c0_i32_20 = arith.constant 0 : i32
    %32 = tpu.memref_slice %arg3[%c6_i32_19, %c0_i32_20] : memref<8x128xf32, #tpu.memory_space<vmem>> -> memref<1x128xf32, #tpu.memory_space<vmem>>
    %33 = tpu.memref_slice %arg4[%c6_i32] : memref<8x!tpu.dma_semaphore, #tpu.memory_space<semaphore_mem>> -> memref<1x!tpu.dma_semaphore, #tpu.memory_space<semaphore_mem>>
    %34 = tpu.memref_squeeze %33 : memref<1x!tpu.dma_semaphore, #tpu.memory_space<semaphore_mem>> -> memref<!tpu.dma_semaphore, #tpu.memory_space<semaphore_mem>>
    tpu.enqueue_dma source(%31 : memref<1x128xf32, #tpu.memory_space<any>>) target(%32 : memref<1x128xf32, #tpu.memory_space<vmem>>) target_semaphore(%34 : memref<!tpu.dma_semaphore, #tpu.memory_space<semaphore_mem>>)
    %c7 = arith.constant 7 : index
    %35 = memref.load %arg1[%c7] : memref<8xi32, #tpu.memory_space<smem>>
    %c7_i32 = arith.constant 7 : i32
    %c0_i32_21 = arith.constant 0 : i32
    %36 = tpu.memref_slice %arg2[%35, %c0_i32_21] : memref<64x128xf32, #tpu.memory_space<any>> -> memref<1x128xf32, #tpu.memory_space<any>>
    %c7_i32_22 = arith.constant 7 : i32
    %c0_i32_23 = arith.constant 0 : i32
    %37 = tpu.memref_slice %arg3[%c7_i32_22, %c0_i32_23] : memref<8x128xf32, #tpu.memory_space<vmem>> -> memref<1x128xf32, #tpu.memory_space<vmem>>
    %38 = tpu.memref_slice %arg4[%c7_i32] : memref<8x!tpu.dma_semaphore, #tpu.memory_space<semaphore_mem>> -> memref<1x!tpu.dma_semaphore, #tpu.memory_space<semaphore_mem>>
    %39 = tpu.memref_squeeze %38 : memref<1x!tpu.dma_semaphore, #tpu.memory_space<semaphore_mem>> -> memref<!tpu.dma_semaphore, #tpu.memory_space<semaphore_mem>>
    tpu.enqueue_dma source(%36 : memref<1x128xf32, #tpu.memory_space<any>>) target(%37 : memref<1x128xf32, #tpu.memory_space<vmem>>) target_semaphore(%39 : memref<!tpu.dma_semaphore, #tpu.memory_space<semaphore_mem>>)
    %c0_i32_24 = arith.constant 0 : i32
    %c0_i32_25 = arith.constant 0 : i32
    %c0_i32_26 = arith.constant 0 : i32
    %40 = tpu.memref_slice %arg2[%c0_i32_25, %c0_i32_26] : memref<64x128xf32, #tpu.memory_space<any>> -> memref<1x128xf32, #tpu.memory_space<any>>
    %c0_i32_27 = arith.constant 0 : i32
    %c0_i32_28 = arith.constant 0 : i32
    %41 = tpu.memref_slice %arg3[%c0_i32_27, %c0_i32_28] : memref<8x128xf32, #tpu.memory_space<vmem>> -> memref<1x128xf32, #tpu.memory_space<vmem>>
    %42 = tpu.memref_slice %arg4[%c0_i32_24] : memref<8x!tpu.dma_semaphore, #tpu.memory_space<semaphore_mem>> -> memref<1x!tpu.dma_semaphore, #tpu.memory_space<semaphore_mem>>
    %43 = tpu.memref_squeeze %42 : memref<1x!tpu.dma_semaphore, #tpu.memory_space<semaphore_mem>> -> memref<!tpu.dma_semaphore, #tpu.memory_space<semaphore_mem>>
    tpu.wait_dma2 semaphore(%43 : memref<!tpu.dma_semaphore, #tpu.memory_space<semaphore_mem>>) src(%40 : memref<1x128xf32, #tpu.memory_space<any>>) dst(%41 : memref<1x128xf32, #tpu.memory_space<vmem>>)
    %c1_i32_29 = arith.constant 1 : i32
    %c0_i32_30 = arith.constant 0 : i32
    %c0_i32_31 = arith.constant 0 : i32
    %44 = tpu.memref_slice %arg2[%c0_i32_30, %c0_i32_31] : memref<64x128xf32, #tpu.memory_space<any>> -> memref<1x128xf32, #tpu.memory_space<any>>
    %c0_i32_32 = arith.constant 0 : i32
    %c0_i32_33 = arith.constant 0 : i32
    %45 = tpu.memref_slice %arg3[%c0_i32_32, %c0_i32_33] : memref<8x128xf32, #tpu.memory_space<vmem>> -> memref<1x128xf32, #tpu.memory_space<vmem>>
    %46 = tpu.memref_slice %arg4[%c1_i32_29] : memref<8x!tpu.dma_semaphore, #tpu.memory_space<semaphore_mem>> -> memref<1x!tpu.dma_semaphore, #tpu.memory_space<semaphore_mem>>
    %47 = tpu.memref_squeeze %46 : memref<1x!tpu.dma_semaphore, #tpu.memory_space<semaphore_mem>> -> memref<!tpu.dma_semaphore, #tpu.memory_space<semaphore_mem>>
    tpu.wait_dma2 semaphore(%47 : memref<!tpu.dma_semaphore, #tpu.memory_space<semaphore_mem>>) src(%44 : memref<1x128xf32, #tpu.memory_space<any>>) dst(%45 : memref<1x128xf32, #tpu.memory_space<vmem>>)
    %c2_i32_34 = arith.constant 2 : i32
    %c0_i32_35 = arith.constant 0 : i32
    %c0_i32_36 = arith.constant 0 : i32
    %48 = tpu.memref_slice %arg2[%c0_i32_35, %c0_i32_36] : memref<64x128xf32, #tpu.memory_space<any>> -> memref<1x128xf32, #tpu.memory_space<any>>
    %c0_i32_37 = arith.constant 0 : i32
    %c0_i32_38 = arith.constant 0 : i32
    %49 = tpu.memref_slice %arg3[%c0_i32_37, %c0_i32_38] : memref<8x128xf32, #tpu.memory_space<vmem>> -> memref<1x128xf32, #tpu.memory_space<vmem>>
    %50 = tpu.memref_slice %arg4[%c2_i32_34] : memref<8x!tpu.dma_semaphore, #tpu.memory_space<semaphore_mem>> -> memref<1x!tpu.dma_semaphore, #tpu.memory_space<semaphore_mem>>
    %51 = tpu.memref_squeeze %50 : memref<1x!tpu.dma_semaphore, #tpu.memory_space<semaphore_mem>> -> memref<!tpu.dma_semaphore, #tpu.memory_space<semaphore_mem>>
    tpu.wait_dma2 semaphore(%51 : memref<!tpu.dma_semaphore, #tpu.memory_space<semaphore_mem>>) src(%48 : memref<1x128xf32, #tpu.memory_space<any>>) dst(%49 : memref<1x128xf32, #tpu.memory_space<vmem>>)
    %c3_i32_39 = arith.constant 3 : i32
    %c0_i32_40 = arith.constant 0 : i32
    %c0_i32_41 = arith.constant 0 : i32
    %52 = tpu.memref_slice %arg2[%c0_i32_40, %c0_i32_41] : memref<64x128xf32, #tpu.memory_space<any>> -> memref<1x128xf32, #tpu.memory_space<any>>
    %c0_i32_42 = arith.constant 0 : i32
    %c0_i32_43 = arith.constant 0 : i32
    %53 = tpu.memref_slice %arg3[%c0_i32_42, %c0_i32_43] : memref<8x128xf32, #tpu.memory_space<vmem>> -> memref<1x128xf32, #tpu.memory_space<vmem>>
    %54 = tpu.memref_slice %arg4[%c3_i32_39] : memref<8x!tpu.dma_semaphore, #tpu.memory_space<semaphore_mem>> -> memref<1x!tpu.dma_semaphore, #tpu.memory_space<semaphore_mem>>
    %55 = tpu.memref_squeeze %54 : memref<1x!tpu.dma_semaphore, #tpu.memory_space<semaphore_mem>> -> memref<!tpu.dma_semaphore, #tpu.memory_space<semaphore_mem>>
    tpu.wait_dma2 semaphore(%55 : memref<!tpu.dma_semaphore, #tpu.memory_space<semaphore_mem>>) src(%52 : memref<1x128xf32, #tpu.memory_space<any>>) dst(%53 : memref<1x128xf32, #tpu.memory_space<vmem>>)
    %c4_i32_44 = arith.constant 4 : i32
    %c0_i32_45 = arith.constant 0 : i32
    %c0_i32_46 = arith.constant 0 : i32
    %56 = tpu.memref_slice %arg2[%c0_i32_45, %c0_i32_46] : memref<64x128xf32, #tpu.memory_space<any>> -> memref<1x128xf32, #tpu.memory_space<any>>
    %c0_i32_47 = arith.constant 0 : i32
    %c0_i32_48 = arith.constant 0 : i32
    %57 = tpu.memref_slice %arg3[%c0_i32_47, %c0_i32_48] : memref<8x128xf32, #tpu.memory_space<vmem>> -> memref<1x128xf32, #tpu.memory_space<vmem>>
    %58 = tpu.memref_slice %arg4[%c4_i32_44] : memref<8x!tpu.dma_semaphore, #tpu.memory_space<semaphore_mem>> -> memref<1x!tpu.dma_semaphore, #tpu.memory_space<semaphore_mem>>
    %59 = tpu.memref_squeeze %58 : memref<1x!tpu.dma_semaphore, #tpu.memory_space<semaphore_mem>> -> memref<!tpu.dma_semaphore, #tpu.memory_space<semaphore_mem>>
    tpu.wait_dma2 semaphore(%59 : memref<!tpu.dma_semaphore, #tpu.memory_space<semaphore_mem>>) src(%56 : memref<1x128xf32, #tpu.memory_space<any>>) dst(%57 : memref<1x128xf32, #tpu.memory_space<vmem>>)
    %c5_i32_49 = arith.constant 5 : i32
    %c0_i32_50 = arith.constant 0 : i32
    %c0_i32_51 = arith.constant 0 : i32
    %60 = tpu.memref_slice %arg2[%c0_i32_50, %c0_i32_51] : memref<64x128xf32, #tpu.memory_space<any>> -> memref<1x128xf32, #tpu.memory_space<any>>
    %c0_i32_52 = arith.constant 0 : i32
    %c0_i32_53 = arith.constant 0 : i32
    %61 = tpu.memref_slice %arg3[%c0_i32_52, %c0_i32_53] : memref<8x128xf32, #tpu.memory_space<vmem>> -> memref<1x128xf32, #tpu.memory_space<vmem>>
    %62 = tpu.memref_slice %arg4[%c5_i32_49] : memref<8x!tpu.dma_semaphore, #tpu.memory_space<semaphore_mem>> -> memref<1x!tpu.dma_semaphore, #tpu.memory_space<semaphore_mem>>
    %63 = tpu.memref_squeeze %62 : memref<1x!tpu.dma_semaphore, #tpu.memory_space<semaphore_mem>> -> memref<!tpu.dma_semaphore, #tpu.memory_space<semaphore_mem>>
    tpu.wait_dma2 semaphore(%63 : memref<!tpu.dma_semaphore, #tpu.memory_space<semaphore_mem>>) src(%60 : memref<1x128xf32, #tpu.memory_space<any>>) dst(%61 : memref<1x128xf32, #tpu.memory_space<vmem>>)
    %c6_i32_54 = arith.constant 6 : i32
    %c0_i32_55 = arith.constant 0 : i32
    %c0_i32_56 = arith.constant 0 : i32
    %64 = tpu.memref_slice %arg2[%c0_i32_55, %c0_i32_56] : memref<64x128xf32, #tpu.memory_space<any>> -> memref<1x128xf32, #tpu.memory_space<any>>
    %c0_i32_57 = arith.constant 0 : i32
    %c0_i32_58 = arith.constant 0 : i32
    %65 = tpu.memref_slice %arg3[%c0_i32_57, %c0_i32_58] : memref<8x128xf32, #tpu.memory_space<vmem>> -> memref<1x128xf32, #tpu.memory_space<vmem>>
    %66 = tpu.memref_slice %arg4[%c6_i32_54] : memref<8x!tpu.dma_semaphore, #tpu.memory_space<semaphore_mem>> -> memref<1x!tpu.dma_semaphore, #tpu.memory_space<semaphore_mem>>
    %67 = tpu.memref_squeeze %66 : memref<1x!tpu.dma_semaphore, #tpu.memory_space<semaphore_mem>> -> memref<!tpu.dma_semaphore, #tpu.memory_space<semaphore_mem>>
    tpu.wait_dma2 semaphore(%67 : memref<!tpu.dma_semaphore, #tpu.memory_space<semaphore_mem>>) src(%64 : memref<1x128xf32, #tpu.memory_space<any>>) dst(%65 : memref<1x128xf32, #tpu.memory_space<vmem>>)
    %c7_i32_59 = arith.constant 7 : i32
    %c0_i32_60 = arith.constant 0 : i32
    %c0_i32_61 = arith.constant 0 : i32
    %68 = tpu.memref_slice %arg2[%c0_i32_60, %c0_i32_61] : memref<64x128xf32, #tpu.memory_space<any>> -> memref<1x128xf32, #tpu.memory_space<any>>
    %c0_i32_62 = arith.constant 0 : i32
    %c0_i32_63 = arith.constant 0 : i32
    %69 = tpu.memref_slice %arg3[%c0_i32_62, %c0_i32_63] : memref<8x128xf32, #tpu.memory_space<vmem>> -> memref<1x128xf32, #tpu.memory_space<vmem>>
    %70 = tpu.memref_slice %arg4[%c7_i32_59] : memref<8x!tpu.dma_semaphore, #tpu.memory_space<semaphore_mem>> -> memref<1x!tpu.dma_semaphore, #tpu.memory_space<semaphore_mem>>
    %71 = tpu.memref_squeeze %70 : memref<1x!tpu.dma_semaphore, #tpu.memory_space<semaphore_mem>> -> memref<!tpu.dma_semaphore, #tpu.memory_space<semaphore_mem>>
    tpu.wait_dma2 semaphore(%71 : memref<!tpu.dma_semaphore, #tpu.memory_space<semaphore_mem>>) src(%68 : memref<1x128xf32, #tpu.memory_space<any>>) dst(%69 : memref<1x128xf32, #tpu.memory_space<vmem>>)
    return
  }
  func.func @transform_1(%arg0: i32, %arg1: memref<8xi32, #tpu.memory_space<smem>>) -> (i32, i32) {
    %c0_i32 = arith.constant 0 : i32
    %c0_i32_0 = arith.constant 0 : i32
    %c0_i32_1 = arith.constant 0 : i32
    return %c0_i32, %c0_i32_0 : i32, i32
  }
}

</mosaic_0001>

<llo_original>
// kernel: tpu_custom_call.1
$region0: #{tpu_custom_call.1}
  #allocation0 [shape = 'u32[]', space=smem, size = 0x4, offset = 0x4, fixed_abs, tag = 'smem constant byte address 0x4 - core index']
  #allocation1 [shape = 'u32[72,128]{1,0:T(1,128)}', space=vmem, size = 0x9000, scoped, tag = 'internal scratch']
  #allocation2 [shape = 's32[8]{0}', space=sflag, size = 0x20, scoped, tag = 'scratch operand']
  #allocation3 [shape = 's32[1]{0}', space=sflag, size = 0x4, scoped, tag = 'scoped memory for tpu_custom_call.1']
  #allocation4 [shape = 'u8[512]{0}', space=smem, size = 0x200, scoped, tag = 'prefetched SMEM operand 0']
  #allocation7 [shape = 's32[]', space=sflag, size = 0x4, offset = 0, fixed_abs, tag = 'sflag constant byte address 0x0 - dummy sync flag']
  #allocation8 [shape = 's32[]', space=sflag, size = 0x4, offset = 0, fixed_abs, tag = 'sflag constant byte address 0x0 - dummy sync flag']
  #allocation9 [shape = 'u32[]', space=smem, size = 0x4, offset = 0x44, fixed_abs, tag = 'smem constant byte address 0x44 - assertion arg 0']
  #allocation10 [shape = 'u32[]', space=smem, size = 0x4, offset = 0x48, fixed_abs, tag = 'smem constant byte address 0x48 - assertion arg 1']
  #allocation11 [shape = 's32[]', space=sflag, size = 0x4, offset = 0, fixed_abs, tag = 'sflag constant byte address 0x0 - dummy sync flag']
  #allocation12 [shape = 's32[]', space=sflag, size = 0x4, offset = 0, fixed_abs, tag = 'sflag constant byte address 0x0 - dummy sync flag']
  #allocation13 [shape = 's32[]', space=sflag, size = 0x4, offset = 0, fixed_abs, tag = 'sflag constant byte address 0x0 - dummy sync flag']
  #allocation14 [shape = 's32[]', space=sflag, size = 0x4, offset = 0, fixed_abs, tag = 'sflag constant byte address 0x0 - dummy sync flag']
  #allocation15 [shape = 's32[]', space=sflag, size = 0x4, offset = 0, fixed_abs, tag = 'sflag constant byte address 0x0 - dummy sync flag']
  #allocation16 [shape = 's32[]', space=sflag, size = 0x4, offset = 0, fixed_abs, tag = 'sflag constant byte address 0x0 - dummy sync flag']
  #allocation17 [shape = 's32[]', space=sflag, size = 0x4, offset = 0, fixed_abs, tag = 'sflag constant byte address 0x0 - dummy sync flag']
  #allocation18 [shape = 's32[]', space=sflag, size = 0x4, offset = 0, fixed_abs, tag = 'sflag constant byte address 0x0 - dummy sync flag']
  #allocation19 [shape = 's32[]', space=sflag, size = 0x4, offset = 0, fixed_abs, tag = 'sflag constant byte address 0x0 - dummy sync flag']
  #allocation20 [shape = 's32[]', space=sflag, size = 0x4, offset = 0, fixed_abs, tag = 'sflag constant byte address 0x0 - dummy sync flag']
  #allocation21 [shape = 's32[]', space=sflag, size = 0x4, offset = 0, fixed_abs, tag = 'sflag constant byte address 0x0 - dummy sync flag']
  #allocation22 [shape = 's32[]', space=sflag, size = 0x4, offset = 0, fixed_abs, tag = 'sflag constant byte address 0x0 - dummy sync flag']
  #allocation23 [shape = 's32[]', space=sflag, size = 0x4, offset = 0, fixed_abs, tag = 'sflag constant byte address 0x0 - dummy sync flag']
  #allocation24 [shape = 's32[]', space=sflag, size = 0x4, offset = 0, fixed_abs, tag = 'sflag constant byte address 0x0 - dummy sync flag']
  %s0 = inlined_call_operand.hbm [shape: s32[8], index: 0, kind: input, shape index: {}]
  %s1 = inlined_call_operand.hbm [shape: f32[64,128], index: 1, kind: input, shape index: {}]
  %s2 = inlined_call_operand.hbm [shape: f32[8,128], index: 2, kind: output, shape index: {}]
  %s3 = sld [smem:[#allocation0]]
  $region42: #{tpu_custom_call.1} parent=0
    _
  %s5 = ssub.s32 1, %s3
  %s6 = scalar_select 0, %s5, %s3
  %s8 = sshll.u32 %s0, 4
  %s9 = int_to_ptr.hbm [resolvable:$true] %s8
  %11 = dma.hbm_to_smem %s9, 16, [#allocation4], [#allocation3]
  %13 = dma.done [#allocation3], 16
  %14 = sfence
  $region1: #{tpu_custom_call.1} parent=0
    #allocation5 [shape = 'u8[4096]{0}', space=vmem, size = 0x1000, scoped, tag = 'output window, operand 0, single buffered']
    #allocation6 [shape = 's32[1]{0}', space=sflag, size = 0x4, scoped, tag = 'scoped memory for tpu_custom_call.1']
    %15 = vsyncpa [#allocation6], 0
    %s16 = sld [smem:[#allocation4]]
    %s17 = scalar_lea.hbm %s1, %s16
    // Predicated region
    $region2: #{tpu_custom_call.1} parent=1 // pred_check
      _
    $region3: #{tpu_custom_call.1} parent=1 // pred_check_branch
      %19 = sbr.rel target = $region5
    $region4: #{tpu_custom_call.1} parent=1 // pred_region
      %20 = sst [smem:[#allocation9]] [#allocation8]
      %21 = sst [smem:[#allocation10]] [#allocation7]
    $region5: #{tpu_custom_call.1} parent=1 // pred_fallthru
      _
    %23 = shalt.err (0)
    %s25 = sshll.u32 %s17, 4
    %s26 = int_to_ptr.hbm [resolvable:$true] %s25
    %s27 = sshll.u32 [#allocation5], 4
    %s28 = int_to_ptr.vmem [resolvable:$true] %s27
    %30 = dma.hbm_to_vmem [thread:$0]  %s26, 16, %s28, [#allocation2]
    %s31 = sld [smem:[#allocation4 + $0x1]]
    %s32 = scalar_lea.hbm %s1, %s31
    %s33 = scalar_lea.vmem [#allocation5], 1
    %s34 = scalar_lea.sflag [#allocation2], 1
    // Predicated region
    $region6: #{tpu_custom_call.1} parent=1 // pred_check
      _
    $region7: #{tpu_custom_call.1} parent=1 // pred_check_branch
      %36 = sbr.rel target = $region9
    $region8: #{tpu_custom_call.1} parent=1 // pred_region
      %37 = sst [smem:[#allocation9]] [#allocation12]
      %38 = sst [smem:[#allocation10]] [#allocation11]
    $region9: #{tpu_custom_call.1} parent=1 // pred_fallthru
      _
    %40 = shalt.err (0)
    %s42 = sshll.u32 %s32, 4
    %s43 = int_to_ptr.hbm [resolvable:$true] %s42
    %s44 = sshll.u32 %s33, 4
    %s45 = int_to_ptr.vmem [resolvable:$true] %s44
    %47 = dma.hbm_to_vmem [thread:$0]  %s43, 16, %s45, %s34
    %s48 = sld [smem:[#allocation4 + $0x2]]
    %s49 = scalar_lea.hbm %s1, %s48
    %s50 = scalar_lea.vmem [#allocation5], 2
    %s51 = scalar_lea.sflag [#allocation2], 2
    // Predicated region
    $region10: #{tpu_custom_call.1} parent=1 // pred_check
      _
    $region11: #{tpu_custom_call.1} parent=1 // pred_check_branch
      %53 = sbr.rel target = $region13
    $region12: #{tpu_custom_call.1} parent=1 // pred_region
      %54 = sst [smem:[#allocation9]] [#allocation14]
      %55 = sst [smem:[#allocation10]] [#allocation13]
    $region13: #{tpu_custom_call.1} parent=1 // pred_fallthru
      _
    %57 = shalt.err (0)
    %s59 = sshll.u32 %s49, 4
    %s60 = int_to_ptr.hbm [resolvable:$true] %s59
    %s61 = sshll.u32 %s50, 4
    %s62 = int_to_ptr.vmem [resolvable:$true] %s61
    %64 = dma.hbm_to_vmem [thread:$0]  %s60, 16, %s62, %s51
    %s65 = sld [smem:[#allocation4 + $0x3]]
    %s66 = scalar_lea.hbm %s1, %s65
    %s67 = scalar_lea.vmem [#allocation5], 3
    %s68 = scalar_lea.sflag [#allocation2], 3
    // Predicated region
    $region14: #{tpu_custom_call.1} parent=1 // pred_check
      _
    $region15: #{tpu_custom_call.1} parent=1 // pred_check_branch
      %70 = sbr.rel target = $region17
    $region16: #{tpu_custom_call.1} parent=1 // pred_region
      %71 = sst [smem:[#allocation9]] [#allocation16]
      %72 = sst [smem:[#allocation10]] [#allocation15]
    $region17: #{tpu_custom_call.1} parent=1 // pred_fallthru
      _
    %74 = shalt.err (0)
    %s76 = sshll.u32 %s66, 4
    %s77 = int_to_ptr.hbm [resolvable:$true] %s76
    %s78 = sshll.u32 %s67, 4
    %s79 = int_to_ptr.vmem [resolvable:$true] %s78
    %81 = dma.hbm_to_vmem [thread:$0]  %s77, 16, %s79, %s68
    %s82 = sld [smem:[#allocation4 + $0x4]]
    %s83 = scalar_lea.hbm %s1, %s82
    %s84 = scalar_lea.vmem [#allocation5], 4
    %s85 = scalar_lea.sflag [#allocation2], 4
    // Predicated region
    $region18: #{tpu_custom_call.1} parent=1 // pred_check
      _
    $region19: #{tpu_custom_call.1} parent=1 // pred_check_branch
      %87 = sbr.rel target = $region21
    $region20: #{tpu_custom_call.1} parent=1 // pred_region
      %88 = sst [smem:[#allocation9]] [#allocation18]
      %89 = sst [smem:[#allocation10]] [#allocation17]
    $region21: #{tpu_custom_call.1} parent=1 // pred_fallthru
      _
    %91 = shalt.err (0)
    %s93 = sshll.u32 %s83, 4
    %s94 = int_to_ptr.hbm [resolvable:$true] %s93
    %s95 = sshll.u32 %s84, 4
    %s96 = int_to_ptr.vmem [resolvable:$true] %s95
    %98 = dma.hbm_to_vmem [thread:$0]  %s94, 16, %s96, %s85
    %s99 = sld [smem:[#allocation4 + $0x5]]
    %s100 = scalar_lea.hbm %s1, %s99
    %s101 = scalar_lea.vmem [#allocation5], 5
    %s102 = scalar_lea.sflag [#allocation2], 5
    // Predicated region
    $region22: #{tpu_custom_call.1} parent=1 // pred_check
      _
    $region23: #{tpu_custom_call.1} parent=1 // pred_check_branch
      %104 = sbr.rel target = $region25
    $region24: #{tpu_custom_call.1} parent=1 // pred_region
      %105 = sst [smem:[#allocation9]] [#allocation20]
      %106 = sst [smem:[#allocation10]] [#allocation19]
    $region25: #{tpu_custom_call.1} parent=1 // pred_fallthru
      _
    %108 = shalt.err (0)
    %s110 = sshll.u32 %s100, 4
    %s111 = int_to_ptr.hbm [resolvable:$true] %s110
    %s112 = sshll.u32 %s101, 4
    %s113 = int_to_ptr.vmem [resolvable:$true] %s112
    %115 = dma.hbm_to_vmem [thread:$0]  %s111, 16, %s113, %s102
    %s116 = sld [smem:[#allocation4 + $0x6]]
    %s117 = scalar_lea.hbm %s1, %s116
    %s118 = scalar_lea.vmem [#allocation5], 6
    %s119 = scalar_lea.sflag [#allocation2], 6
    // Predicated region
    $region26: #{tpu_custom_call.1} parent=1 // pred_check
      _
    $region27: #{tpu_custom_call.1} parent=1 // pred_check_branch
      %121 = sbr.rel target = $region29
    $region28: #{tpu_custom_call.1} parent=1 // pred_region
      %122 = sst [smem:[#allocation9]] [#allocation22]
      %123 = sst [smem:[#allocation10]] [#allocation21]
    $region29: #{tpu_custom_call.1} parent=1 // pred_fallthru
      _
    %125 = shalt.err (0)
    %s127 = sshll.u32 %s117, 4
    %s128 = int_to_ptr.hbm [resolvable:$true] %s127
    %s129 = sshll.u32 %s118, 4
    %s130 = int_to_ptr.vmem [resolvable:$true] %s129
    %132 = dma.hbm_to_vmem [thread:$0]  %s128, 16, %s130, %s119
    %s133 = sld [smem:[#allocation4 + $0x7]]
    %s134 = scalar_lea.hbm %s1, %s133
    %s135 = scalar_lea.vmem [#allocation5], 7
    %s136 = scalar_lea.sflag [#allocation2], 7
    // Predicated region
    $region30: #{tpu_custom_call.1} parent=1 // pred_check
      _
    $region31: #{tpu_custom_call.1} parent=1 // pred_check_branch
      %138 = sbr.rel target = $region33
    $region32: #{tpu_custom_call.1} parent=1 // pred_region
      %139 = sst [smem:[#allocation9]] [#allocation24]
      %140 = sst [smem:[#allocation10]] [#allocation23]
    $region33: #{tpu_custom_call.1} parent=1 // pred_fallthru
      _
    %142 = shalt.err (0)
    %s144 = sshll.u32 %s134, 4
    %s145 = int_to_ptr.hbm [resolvable:$true] %s144
    %s146 = sshll.u32 %s135, 4
    %s147 = int_to_ptr.vmem [resolvable:$true] %s146
    %149 = dma.hbm_to_vmem [thread:$0]  %s145, 16, %s147, %s136
    %s150 = smul.u32 1, 1
    %s151 = sshll.u32 %s150, 4
    %152 = dma.done [#allocation2], %s151
    %s153 = sshll.u32 %s150, 4
    %154 = dma.done %s34, %s153
    %s155 = sshll.u32 %s150, 4
    %156 = dma.done %s51, %s155
    %s157 = sshll.u32 %s150, 4
    %158 = dma.done %s68, %s157
    %s159 = sshll.u32 %s150, 4
    %160 = dma.done %s85, %s159
    %s161 = sshll.u32 %s150, 4
    %162 = dma.done %s102, %s161
    %s163 = sshll.u32 %s150, 4
    %164 = dma.done %s119, %s163
    %s165 = sshll.u32 %s150, 4
    %166 = dma.done %s136, %s165
    // Predicated region
    $region34: #{tpu_custom_call.1} parent=1 // pred_check
      _
    $region35: #{tpu_custom_call.1} parent=1 // pred_check_branch
      %168 = sbr.rel (0) target = $region37
    $region36: #{tpu_custom_call.1} parent=1 // pred_region
      %170 = vsyncadd [#allocation6], 0
      %s172 = sshll.u32 [#allocation5], 4
      %s173 = int_to_ptr.vmem [resolvable:$true] %s172
      %s174 = sshll.u32 %s2, 4
      %s175 = int_to_ptr.hbm [resolvable:$true] %s174
      %177 = dma.vmem_to_hbm [thread:$0]  %s173, 128, %s175, [#allocation6]
    $region37: #{tpu_custom_call.1} parent=1 // pred_fallthru
      _
    // Predicated region
    $region38: #{tpu_custom_call.1} parent=1 // pred_check
      _
    $region39: #{tpu_custom_call.1} parent=1 // pred_check_branch
      %179 = sbr.rel (0) target = $region41
    $region40: #{tpu_custom_call.1} parent=1 // pred_region
      %181 = dma.done [#allocation6], 128
    $region41: #{tpu_custom_call.1} parent=1 // pred_fallthru
      _
    %182 = vsyncpa [#allocation6], 1
  %183 = vsyncmov [#allocation2]
  %s184 = vpop.sfrf %183
  %p185 = scmp.eq.s32.totalorder %s184, 0
  %p186 = pneg %p185
  %188 = shalt.err (%p186)
  %s189 = scalar_lea.sflag [#allocation2], 1
  %190 = vsyncmov %s189
  %s191 = vpop.sfrf %190
  %p192 = scmp.eq.s32.totalorder %s191, 0
  %p193 = pneg %p192
  %195 = shalt.err (%p193)
  %s196 = scalar_lea.sflag [#allocation2], 2
  %197 = vsyncmov %s196
  %s198 = vpop.sfrf %197
  %p199 = scmp.eq.s32.totalorder %s198, 0
  %p200 = pneg %p199
  %202 = shalt.err (%p200)
  %s203 = scalar_lea.sflag [#allocation2], 3
  %204 = vsyncmov %s203
  %s205 = vpop.sfrf %204
  %p206 = scmp.eq.s32.totalorder %s205, 0
  %p207 = pneg %p206
  %209 = shalt.err (%p207)
  %s210 = scalar_lea.sflag [#allocation2], 4
  %211 = vsyncmov %s210
  %s212 = vpop.sfrf %211
  %p213 = scmp.eq.s32.totalorder %s212, 0
  %p214 = pneg %p213
  %216 = shalt.err (%p214)
  %s217 = scalar_lea.sflag [#allocation2], 5
  %218 = vsyncmov %s217
  %s219 = vpop.sfrf %218
  %p220 = scmp.eq.s32.totalorder %s219, 0
  %p221 = pneg %p220
  %223 = shalt.err (%p221)
  %s224 = scalar_lea.sflag [#allocation2], 6
  %225 = vsyncmov %s224
  %s226 = vpop.sfrf %225
  %p227 = scmp.eq.s32.totalorder %s226, 0
  %p228 = pneg %p227
  %230 = shalt.err (%p228)
  %s231 = scalar_lea.sflag [#allocation2], 7
  %232 = vsyncmov %s231
  %s233 = vpop.sfrf %232
  %p234 = scmp.eq.s32.totalorder %s233, 0
  %p235 = pneg %p234
  %237 = shalt.err (%p235)

</llo_original>
